<compile_context>
chip_gen: v7x
topology: tpu7x:2x2x1
jax: 0.10.0
libtpu: 0.0.40
codegen_flags: <defaults>
</compile_context>

<pallas_src>
import functools

import jax
import jax.numpy as jnp
from jax.experimental import pallas as pl
from jax.experimental.pallas import tpu as pltpu
import numpy as np


# ----------------------------------------------------------------------------
# Pallas kernel: fully unrolled Euler ODE integration + prediction head
# ----------------------------------------------------------------------------
def _cdecf_kernel(e_ref, a_ref, w1_ref, w2_ref, bias_ref, out_ref, *,
                  n_steps, dt):
    f32 = jnp.float32
    B2, D = e_ref.shape
    B = B2 // 2
    H = w1_ref.shape[1]

    # Loop-invariant loads (the Euler loop below is fully unrolled).
    a = a_ref[...]                          # (2B, 2B) bf16
    w1 = w1_ref[...]                        # (2D, H)  bf16
    w2 = w2_ref[...]                        # (H, D)   bf16
    cdt = a.dtype                           # bf16 compute dtype for the MXU

    bias = bias_ref[...]                    # (1, H + D) f32
    b1b = jnp.broadcast_to(bias[:, :H], (B, H))   # hoisted broadcasts
    b2b = jnp.broadcast_to(bias[:, H:], (B, D))

    e = e_ref[...]                          # (2B, D) f32 carried state

    # Fixed-step Euler over n_steps-1 intervals (static trip count -> unrolled).
    for _ in range(n_steps - 1):
        e_b = e.astype(cdt)

        # Graph propagation: ONE fused adjacency matmul on the stacked state.
        ge = jnp.dot(a, e_b, preferred_element_type=f32)          # (2B, D)
        eff = ge - e

        # Weight generator: x = [E_u | E_i] (lane concat), Linear->ReLU->Linear->Sigmoid.
        x_b = jnp.concatenate([e[:B], e[B:]], axis=1).astype(cdt)  # (B, 2D)
        h = jnp.dot(x_b, w1, preferred_element_type=f32) + b1b
        h = jnp.maximum(h, 0.0)
        z = jnp.dot(h.astype(cdt), w2, preferred_element_type=f32) + b2b
        w = jax.nn.sigmoid(z)                                       # (B, D) f32

        w_full = jnp.concatenate([w, w], axis=0)                    # (2B, D)
        e = e + dt * (w_full * eff)

    # Prediction head: sigmoid(sum(E_u_final * E_i_final, axis=1)), written
    # lane-dense as (1, B) via a K=D contraction (no masked column store).
    prod = e[:B] * e[B:]                                            # (B, D) f32
    ones_row = jnp.ones((1, D), f32)
    pred = jnp.einsum('od,bd->ob', ones_row, prod,
                      preferred_element_type=f32)                   # (1, B)
    out_ref[...] = jax.nn.sigmoid(pred)


def cdecf_forward_pallas(e0, a_packed, w1, w2, bias, *, n_steps, dt):
    B2, _ = e0.shape
    B = B2 // 2
    kernel = functools.partial(_cdecf_kernel, n_steps=n_steps, dt=float(dt))
    vmem = pl.BlockSpec(memory_space=pltpu.MemorySpace.VMEM)

    out = pl.pallas_call(
        kernel,
        out_shape=jax.ShapeDtypeStruct((1, B), jnp.float32),
        in_specs=[vmem, vmem, vmem, vmem, vmem],
        out_specs=vmem,
    )(e0, a_packed, w1, w2, bias)
    return out[0]                     # (B,)


# ----------------------------------------------------------------------------
# Wrapper-side preprocessing: packed adjacency, stacked state, bf16 casts,
# concatenated bias.
# ----------------------------------------------------------------------------
def preprocess_inputs(adj, w1, b1, w2, b2, e_u0, e_i0, *, num_users,
                      compute_dtype=jnp.bfloat16):
    B, _ = e_u0.shape
    N = adj.shape[0]
    assert B <= num_users and num_users + B <= N, \
        "original scatter semantics require B <= num_users and B <= num_items"
    u = slice(0, B)
    i = slice(num_users, num_users + B)
    a_packed = jnp.concatenate(
        [jnp.concatenate([adj[u, u], adj[u, i]], axis=1),
         jnp.concatenate([adj[i, u], adj[i, i]], axis=1)],
        axis=0).astype(compute_dtype)                     # (2B, 2B)
    e0 = jnp.concatenate([e_u0, e_i0], axis=0)            # (2B, D) f32
    w1c = w1.astype(compute_dtype)                        # (2D, H)
    w2c = w2.astype(compute_dtype)                        # (H, D)
    bias = jnp.concatenate([b1, b2], axis=1)              # (1, H + D) f32
    return e0, a_packed, w1c, w2c, bias


# ----------------------------------------------------------------------------
# Pure-JAX references
# ----------------------------------------------------------------------------
def cdecf_forward_mirror(e0, a, w1, w2, bias, *, n_steps, dt):
    """Exact pure-JAX mirror of the kernel math (same bf16 casts / fusions)."""
    f32 = jnp.float32
    cdt = a.dtype
    B = e0.shape[0] // 2
    H = w1.shape[1]
    b1 = bias[:, :H]
    b2 = bias[:, H:]
    e = e0
    for _ in range(n_steps - 1):
        e_b = e.astype(cdt)
        ge = jnp.dot(a, e_b, preferred_element_type=f32)
        eff = ge - e
        x_b = jnp.concatenate([e[:B], e[B:]], axis=1).astype(cdt)
        h = jnp.maximum(jnp.dot(x_b, w1, preferred_element_type=f32) + b1, 0.0)
        w = jax.nn.sigmoid(jnp.dot(h.astype(cdt), w2,
                                   preferred_element_type=f32) + b2)
        e = e + dt * (jnp.concatenate([w, w], axis=0) * eff)
    return jax.nn.sigmoid(jnp.sum(e[:B] * e[B:], axis=1))


def cdecf_forward_semantic(x0, adj, w1, b1, w2, b2, *,
                           latent_dim, num_users, n_steps, dt):
    """Original-module semantics: full (N,N) f32 adjacency + zero-scatter."""
    D = latent_dim
    B = x0.shape[0]
    N = adj.shape[0]
    hi = jax.lax.Precision.HIGHEST

    def ode_func(x):
        E_u, E_i = x[:, :D], x[:, D:]
        full = jnp.zeros((N, D), jnp.float32)
        full = full.at[0:B].set(E_u)
        full = full.at[num_users:num_users + B].set(E_i)
        ge = jnp.dot(adj, full, precision=hi)
        eff_u = ge[0:B] - E_u
        eff_i = ge[num_users:num_users + B] - E_i
        h = jnp.maximum(jnp.dot(x, w1, precision=hi) + b1, 0.0)
        w = jax.nn.sigmoid(jnp.dot(h, w2, precision=hi) + b2)
        return jnp.concatenate([w * eff_u, w * eff_i], axis=1)

    x = x0
    for _ in range(n_steps - 1):
        x = x + dt * ode_func(x)
    Eu_f, Ei_f = x[:, :D], x[:, D:]
    return jax.nn.sigmoid(jnp.sum(Eu_f * Ei_f, axis=1))


# ----------------------------------------------------------------------------
# Setup glue: dense normalized joint adjacency (mirrors _build_joint_adjacency
# + _normalize_adj of the PyTorch module)
# ----------------------------------------------------------------------------
def build_normalized_adj(interactions, num_users, num_items):
    N = num_users + num_items
    A = jnp.zeros((N, N), jnp.float32)
    A = A.at[:num_users, num_users:].set(interactions)
    A = A.at[num_users:, :num_users].set(interactions.T)
    rowsum = A.sum(axis=1)
    d_inv_sqrt = jnp.where(rowsum > 0, rowsum ** -0.5, 0.0)
    return d_inv_sqrt[:, None] * A * d_inv_sqrt[None, :]


if __name__ == "__main__":
    # Small deterministic config.
    num_users, num_items = 8, 8
    latent_dim = 16
    hidden = 64
    batch = 4
    ode_time = 1.0
    ode_steps = 4
    dt = ode_time / (ode_steps - 1)

    key = jax.random.PRNGKey(0)
    k_ue, k_ie, k_int, k_w1, k_b1, k_w2, k_b2 = jax.random.split(key, 7)

    # Embeddings (scaled up from the module's 0.01 init so the numeric check
    # is discriminative — predictions spread well away from 0.5).
    user_emb = 0.1 * jax.random.normal(k_ue, (num_users, latent_dim), jnp.float32)
    item_emb = 0.1 * jax.random.normal(k_ie, (num_items, latent_dim), jnp.float32)

    # Synthetic binary user-item interactions -> normalized joint adjacency.
    interactions = (jax.random.uniform(k_int, (num_users, num_items)) < 0.4
                    ).astype(jnp.float32)
    adj = build_normalized_adj(interactions, num_users, num_items)

    # Weight-generator MLP params (W stored as (in_features, out_features)).
    w1 = 0.1 * jax.random.normal(k_w1, (2 * latent_dim, hidden), jnp.float32)
    b1 = 0.1 * jax.random.normal(k_b1, (1, hidden), jnp.float32)
    w2 = 0.1 * jax.random.normal(k_w2, (hidden, latent_dim), jnp.float32)
    b2 = 0.1 * jax.random.normal(k_b2, (1, latent_dim), jnp.float32)

    # Batch of (user, item) pairs.
    users = jnp.array([0, 1, 2, 3], jnp.int32)
    items = jnp.array([1, 3, 5, 7], jnp.int32)
    E_u0 = jnp.take(user_emb, users, axis=0)
    E_i0 = jnp.take(item_emb, items, axis=0)

    # Wrapper-side preprocessing (packed adjacency, stacked state, bf16 casts).
    e0, a_packed, w1c, w2c, bias = preprocess_inputs(
        adj, w1, b1, w2, b2, E_u0, E_i0, num_users=num_users)

    preds = cdecf_forward_pallas(e0, a_packed, w1c, w2c, bias,
                                 n_steps=ode_steps, dt=dt)
    preds = jax.block_until_ready(preds)

    # Check 1 (tight): kernel vs. exact pure-JAX mirror of the same math.
    mirror = cdecf_forward_mirror(e0, a_packed, w1c, w2c, bias,
                                  n_steps=ode_steps, dt=dt)
    np.testing.assert_allclose(np.asarray(preds), np.asarray(mirror),
                               rtol=1e-4, atol=1e-4)

    # Check 2 (looser, covers bf16 quantization): kernel vs. original-module
    # semantics with the full (N,N) f32 adjacency and zero-scatter.
    x0 = jnp.concatenate([E_u0, E_i0], axis=1)
    semantic = cdecf_forward_semantic(
        x0, adj, w1, b1, w2, b2,
        latent_dim=latent_dim, num_users=num_users, n_steps=ode_steps, dt=dt)
    np.testing.assert_allclose(np.asarray(preds), np.asarray(semantic),
                               rtol=2e-3, atol=2e-3)

    assert preds.shape == (batch,)
    print("KERNEL_OK")
</pallas_src>

<mosaic_0001>
module attributes {stable_mosaic.version = 11 : i64} {
  func.func @_cdecf_kernel(%arg0: memref<8x16xf32, #tpu.memory_space<vmem>>, %arg1: memref<8x8xbf16, #tpu.memory_space<vmem>>, %arg2: memref<32x64xbf16, #tpu.memory_space<vmem>>, %arg3: memref<64x16xbf16, #tpu.memory_space<vmem>>, %arg4: memref<1x80xf32, #tpu.memory_space<vmem>>, %arg5: memref<1x4xf32, #tpu.memory_space<vmem>>) attributes {dimension_semantics = [], scalar_prefetch = 0 : i64, scratch_operands = 0 : i64, tpu.core_type = #tpu.core_type<tc>} {
    %c0 = arith.constant 0 : index
    %c0_0 = arith.constant 0 : index
    %0 = vector.load %arg1[%c0, %c0_0] : memref<8x8xbf16, #tpu.memory_space<vmem>>, vector<8x8xbf16>
    %c0_1 = arith.constant 0 : index
    %c0_2 = arith.constant 0 : index
    %1 = vector.load %arg2[%c0_1, %c0_2] : memref<32x64xbf16, #tpu.memory_space<vmem>>, vector<32x64xbf16>
    %c0_3 = arith.constant 0 : index
    %c0_4 = arith.constant 0 : index
    %2 = vector.load %arg3[%c0_3, %c0_4] : memref<64x16xbf16, #tpu.memory_space<vmem>>, vector<64x16xbf16>
    %c0_5 = arith.constant 0 : index
    %c0_6 = arith.constant 0 : index
    %3 = vector.load %arg4[%c0_5, %c0_6] : memref<1x80xf32, #tpu.memory_space<vmem>>, vector<1x80xf32>
    %4 = vector.extract_strided_slice %3 {offsets = [0, 0], sizes = [1, 64], strides = [1, 1]} : vector<1x80xf32> to vector<1x64xf32>
    %5 = vector.shape_cast %4 : vector<1x64xf32> to vector<1x64xf32>
    %6 = vector.broadcast %5 : vector<1x64xf32> to vector<4x64xf32>
    %7 = vector.extract_strided_slice %3 {offsets = [0, 64], sizes = [1, 16], strides = [1, 1]} : vector<1x80xf32> to vector<1x16xf32>
    %8 = vector.shape_cast %7 : vector<1x16xf32> to vector<1x16xf32>
    %9 = vector.broadcast %8 : vector<1x16xf32> to vector<4x16xf32>
    %c0_7 = arith.constant 0 : index
    %c0_8 = arith.constant 0 : index
    %10 = vector.load %arg0[%c0_7, %c0_8] : memref<8x16xf32, #tpu.memory_space<vmem>>, vector<8x16xf32>
    %11 = arith.truncf %10 : vector<8x16xf32> to vector<8x16xbf16>
    %cst = arith.constant dense<0.000000e+00> : vector<8x16xf32>
    %12 = tpu.matmul %0, %11, %cst {dimension_numbers = #tpu.dot_dimension_numbers<[1], [0], [0], [1], [0, 0, 1, 1], [], []>} : vector<8x8xbf16>, vector<8x16xbf16>, vector<8x16xf32> -> vector<8x16xf32>
    %13 = arith.subf %12, %10 : vector<8x16xf32>
    %14 = vector.extract_strided_slice %10 {offsets = [0, 0], sizes = [4, 16], strides = [1, 1]} : vector<8x16xf32> to vector<4x16xf32>
    %15 = vector.extract_strided_slice %10 {offsets = [4, 0], sizes = [4, 16], strides = [1, 1]} : vector<8x16xf32> to vector<4x16xf32>
    %16 = tpu.concatenate %14, %15 in 1 : vector<4x16xf32>, vector<4x16xf32> -> vector<4x32xf32>
    %17 = arith.truncf %16 : vector<4x32xf32> to vector<4x32xbf16>
    %cst_9 = arith.constant dense<0.000000e+00> : vector<4x64xf32>
    %18 = tpu.matmul %17, %1, %cst_9 {dimension_numbers = #tpu.dot_dimension_numbers<[1], [0], [0], [1], [0, 0, 1, 1], [], []>} : vector<4x32xbf16>, vector<32x64xbf16>, vector<4x64xf32> -> vector<4x64xf32>
    %19 = arith.addf %18, %6 : vector<4x64xf32>
    %cst_10 = arith.constant 0.000000e+00 : f32
    %20 = vector.broadcast %cst_10 : f32 to vector<4x64xf32>
    %21 = arith.maximumf %19, %20 : vector<4x64xf32>
    %22 = arith.truncf %21 : vector<4x64xf32> to vector<4x64xbf16>
    %cst_11 = arith.constant dense<0.000000e+00> : vector<4x16xf32>
    %23 = tpu.matmul %22, %2, %cst_11 {dimension_numbers = #tpu.dot_dimension_numbers<[1], [0], [0], [1], [0, 0, 1, 1], [], []>} : vector<4x64xbf16>, vector<64x16xbf16>, vector<4x16xf32> -> vector<4x16xf32>
    %24 = arith.addf %23, %9 : vector<4x16xf32>
    %25 = arith.negf %24 : vector<4x16xf32>
    %26 = math.exp %25 : vector<4x16xf32>
    %cst_12 = arith.constant 1.000000e+00 : f32
    %27 = vector.broadcast %cst_12 : f32 to vector<4x16xf32>
    %28 = arith.addf %27, %26 : vector<4x16xf32>
    %29 = arith.divf %27, %28 : vector<4x16xf32>
    %30 = tpu.concatenate %29, %29 in 0 : vector<4x16xf32>, vector<4x16xf32> -> vector<8x16xf32>
    %31 = arith.mulf %30, %13 : vector<8x16xf32>
    %cst_13 = arith.constant 0.333333343 : f32
    %32 = vector.broadcast %cst_13 : f32 to vector<8x16xf32>
    %33 = arith.mulf %32, %31 : vector<8x16xf32>
    %34 = arith.addf %10, %33 : vector<8x16xf32>
    %35 = arith.truncf %34 : vector<8x16xf32> to vector<8x16xbf16>
    %cst_14 = arith.constant dense<0.000000e+00> : vector<8x16xf32>
    %36 = tpu.matmul %0, %35, %cst_14 {dimension_numbers = #tpu.dot_dimension_numbers<[1], [0], [0], [1], [0, 0, 1, 1], [], []>} : vector<8x8xbf16>, vector<8x16xbf16>, vector<8x16xf32> -> vector<8x16xf32>
    %37 = arith.subf %36, %34 : vector<8x16xf32>
    %38 = vector.extract_strided_slice %34 {offsets = [0, 0], sizes = [4, 16], strides = [1, 1]} : vector<8x16xf32> to vector<4x16xf32>
    %39 = vector.extract_strided_slice %34 {offsets = [4, 0], sizes = [4, 16], strides = [1, 1]} : vector<8x16xf32> to vector<4x16xf32>
    %40 = tpu.concatenate %38, %39 in 1 : vector<4x16xf32>, vector<4x16xf32> -> vector<4x32xf32>
    %41 = arith.truncf %40 : vector<4x32xf32> to vector<4x32xbf16>
    %cst_15 = arith.constant dense<0.000000e+00> : vector<4x64xf32>
    %42 = tpu.matmul %41, %1, %cst_15 {dimension_numbers = #tpu.dot_dimension_numbers<[1], [0], [0], [1], [0, 0, 1, 1], [], []>} : vector<4x32xbf16>, vector<32x64xbf16>, vector<4x64xf32> -> vector<4x64xf32>
    %43 = arith.addf %42, %6 : vector<4x64xf32>
    %cst_16 = arith.constant 0.000000e+00 : f32
    %44 = vector.broadcast %cst_16 : f32 to vector<4x64xf32>
    %45 = arith.maximumf %43, %44 : vector<4x64xf32>
    %46 = arith.truncf %45 : vector<4x64xf32> to vector<4x64xbf16>
    %cst_17 = arith.constant dense<0.000000e+00> : vector<4x16xf32>
    %47 = tpu.matmul %46, %2, %cst_17 {dimension_numbers = #tpu.dot_dimension_numbers<[1], [0], [0], [1], [0, 0, 1, 1], [], []>} : vector<4x64xbf16>, vector<64x16xbf16>, vector<4x16xf32> -> vector<4x16xf32>
    %48 = arith.addf %47, %9 : vector<4x16xf32>
    %49 = arith.negf %48 : vector<4x16xf32>
    %50 = math.exp %49 : vector<4x16xf32>
    %cst_18 = arith.constant 1.000000e+00 : f32
    %51 = vector.broadcast %cst_18 : f32 to vector<4x16xf32>
    %52 = arith.addf %51, %50 : vector<4x16xf32>
    %53 = arith.divf %51, %52 : vector<4x16xf32>
    %54 = tpu.concatenate %53, %53 in 0 : vector<4x16xf32>, vector<4x16xf32> -> vector<8x16xf32>
    %55 = arith.mulf %54, %37 : vector<8x16xf32>
    %cst_19 = arith.constant 0.333333343 : f32
    %56 = vector.broadcast %cst_19 : f32 to vector<8x16xf32>
    %57 = arith.mulf %56, %55 : vector<8x16xf32>
    %58 = arith.addf %34, %57 : vector<8x16xf32>
    %59 = arith.truncf %58 : vector<8x16xf32> to vector<8x16xbf16>
    %cst_20 = arith.constant dense<0.000000e+00> : vector<8x16xf32>
    %60 = tpu.matmul %0, %59, %cst_20 {dimension_numbers = #tpu.dot_dimension_numbers<[1], [0], [0], [1], [0, 0, 1, 1], [], []>} : vector<8x8xbf16>, vector<8x16xbf16>, vector<8x16xf32> -> vector<8x16xf32>
    %61 = arith.subf %60, %58 : vector<8x16xf32>
    %62 = vector.extract_strided_slice %58 {offsets = [0, 0], sizes = [4, 16], strides = [1, 1]} : vector<8x16xf32> to vector<4x16xf32>
    %63 = vector.extract_strided_slice %58 {offsets = [4, 0], sizes = [4, 16], strides = [1, 1]} : vector<8x16xf32> to vector<4x16xf32>
    %64 = tpu.concatenate %62, %63 in 1 : vector<4x16xf32>, vector<4x16xf32> -> vector<4x32xf32>
    %65 = arith.truncf %64 : vector<4x32xf32> to vector<4x32xbf16>
    %cst_21 = arith.constant dense<0.000000e+00> : vector<4x64xf32>
    %66 = tpu.matmul %65, %1, %cst_21 {dimension_numbers = #tpu.dot_dimension_numbers<[1], [0], [0], [1], [0, 0, 1, 1], [], []>} : vector<4x32xbf16>, vector<32x64xbf16>, vector<4x64xf32> -> vector<4x64xf32>
    %67 = arith.addf %66, %6 : vector<4x64xf32>
    %cst_22 = arith.constant 0.000000e+00 : f32
    %68 = vector.broadcast %cst_22 : f32 to vector<4x64xf32>
    %69 = arith.maximumf %67, %68 : vector<4x64xf32>
    %70 = arith.truncf %69 : vector<4x64xf32> to vector<4x64xbf16>
    %cst_23 = arith.constant dense<0.000000e+00> : vector<4x16xf32>
    %71 = tpu.matmul %70, %2, %cst_23 {dimension_numbers = #tpu.dot_dimension_numbers<[1], [0], [0], [1], [0, 0, 1, 1], [], []>} : vector<4x64xbf16>, vector<64x16xbf16>, vector<4x16xf32> -> vector<4x16xf32>
    %72 = arith.addf %71, %9 : vector<4x16xf32>
    %73 = arith.negf %72 : vector<4x16xf32>
    %74 = math.exp %73 : vector<4x16xf32>
    %cst_24 = arith.constant 1.000000e+00 : f32
    %75 = vector.broadcast %cst_24 : f32 to vector<4x16xf32>
    %76 = arith.addf %75, %74 : vector<4x16xf32>
    %77 = arith.divf %75, %76 : vector<4x16xf32>
    %78 = tpu.concatenate %77, %77 in 0 : vector<4x16xf32>, vector<4x16xf32> -> vector<8x16xf32>
    %79 = arith.mulf %78, %61 : vector<8x16xf32>
    %cst_25 = arith.constant 0.333333343 : f32
    %80 = vector.broadcast %cst_25 : f32 to vector<8x16xf32>
    %81 = arith.mulf %80, %79 : vector<8x16xf32>
    %82 = arith.addf %58, %81 : vector<8x16xf32>
    %83 = vector.extract_strided_slice %82 {offsets = [0, 0], sizes = [4, 16], strides = [1, 1]} : vector<8x16xf32> to vector<4x16xf32>
    %84 = vector.extract_strided_slice %82 {offsets = [4, 0], sizes = [4, 16], strides = [1, 1]} : vector<8x16xf32> to vector<4x16xf32>
    %85 = arith.mulf %83, %84 : vector<4x16xf32>
    %cst_26 = arith.constant 1.000000e+00 : f32
    %86 = vector.broadcast %cst_26 : f32 to vector<1x16xf32>
    "tpu.trace_start"() <{level = 10 : i32, message = "od,bd->ob"}> : () -> ()
    %cst_27 = arith.constant dense<0.000000e+00> : vector<1x4xf32>
    %87 = tpu.matmul %86, %85, %cst_27 {dimension_numbers = #tpu.dot_dimension_numbers<[1], [1], [0], [0], [0, 0, 1, 0], [], []>} : vector<1x16xf32>, vector<4x16xf32>, vector<1x4xf32> -> vector<1x4xf32>
    "tpu.trace_stop"() : () -> ()
    %88 = arith.negf %87 : vector<1x4xf32>
    %89 = math.exp %88 : vector<1x4xf32>
    %cst_28 = arith.constant 1.000000e+00 : f32
    %90 = vector.broadcast %cst_28 : f32 to vector<1x4xf32>
    %91 = arith.addf %90, %89 : vector<1x4xf32>
    %92 = arith.divf %90, %91 : vector<1x4xf32>
    %c0_29 = arith.constant 0 : index
    %c0_30 = arith.constant 0 : index
    %93 = vector.load %arg5[%c0_29, %c0_30] : memref<1x4xf32, #tpu.memory_space<vmem>>, vector<1x4xf32>
    tpu.vector_store %arg5[%c0_29, %c0_30], %92 {strides = array<i32>} : memref<1x4xf32, #tpu.memory_space<vmem>>, vector<1x4xf32>,
    return
  }
}

</mosaic_0001>

<llo_original>
// kernel: tpu_custom_call.1
$region0: #{tpu_custom_call.1}
  #allocation0 [shape = 'u32[]', space=smem, size = 0x4, offset = 0x4, fixed_abs, tag = 'smem constant byte address 0x4 - core index']
  #allocation1 [shape = 'u32[144,128]{1,0:T(1,128)}', space=vmem, size = 0x12000, scoped, tag = 'internal scratch']
  %s0 = inlined_call_operand.vmem [shape: f32[8,16], index: 0, kind: input, shape index: {}]
  %s1 = inlined_call_operand.vmem [shape: bf16[8,8], index: 1, kind: input, shape index: {}]
  %s2 = inlined_call_operand.vmem [shape: bf16[32,64], index: 2, kind: input, shape index: {}]
  %s3 = inlined_call_operand.vmem [shape: bf16[64,16], index: 3, kind: input, shape index: {}]
  %s4 = inlined_call_operand.vmem [shape: f32[1,80], index: 4, kind: input, shape index: {}]
  %s5 = inlined_call_operand.hbm [shape: f32[1,4], index: 5, kind: output, shape index: {}]
  %s6 = sld [smem:[#allocation0]]
  $region30: #{tpu_custom_call.1} parent=0
    _
  %s8 = ssub.s32 1, %s6
  %s9 = scalar_select 0, %s8, %s6
  $region1: #{tpu_custom_call.1} parent=0
    #allocation2 [shape = 'u8[512]{0}', space=vmem, size = 0x400, scoped, tag = 'output window, operand 0, single buffered']
    #allocation3 [shape = 's32[1]{0}', space=sflag, size = 0x4, scoped, tag = 'scoped memory for tpu_custom_call.1']
    %10 = vsyncpa [#allocation3], 0
    // Predicated region
    $region2: #{tpu_custom_call.1} parent=1 // pred_check
      _
    $region3: #{tpu_custom_call.1} parent=1 // pred_check_branch
      %12 = sbr.rel (0) target = $region5
    $region4: #{tpu_custom_call.1} parent=1 // pred_region
      _
    $region5: #{tpu_custom_call.1} parent=1 // pred_fallthru
      _
    // Predicated region
    $region6: #{tpu_custom_call.1} parent=1 // pred_check
      _
    $region7: #{tpu_custom_call.1} parent=1 // pred_check_branch
      %14 = sbr.rel (0) target = $region9
    $region8: #{tpu_custom_call.1} parent=1 // pred_region
      _
    $region9: #{tpu_custom_call.1} parent=1 // pred_fallthru
      _
    // Predicated region
    $region10: #{tpu_custom_call.1} parent=1 // pred_check
      _
    $region11: #{tpu_custom_call.1} parent=1 // pred_check_branch
      %16 = sbr.rel (0) target = $region13
    $region12: #{tpu_custom_call.1} parent=1 // pred_region
      _
    $region13: #{tpu_custom_call.1} parent=1 // pred_fallthru
      _
    // Predicated region
    $region14: #{tpu_custom_call.1} parent=1 // pred_check
      _
    $region15: #{tpu_custom_call.1} parent=1 // pred_check_branch
      %18 = sbr.rel (0) target = $region17
    $region16: #{tpu_custom_call.1} parent=1 // pred_region
      _
    $region17: #{tpu_custom_call.1} parent=1 // pred_fallthru
      _
    // Predicated region
    $region18: #{tpu_custom_call.1} parent=1 // pred_check
      _
    $region19: #{tpu_custom_call.1} parent=1 // pred_check_branch
      %20 = sbr.rel (0) target = $region21
    $region20: #{tpu_custom_call.1} parent=1 // pred_region
      _
    $region21: #{tpu_custom_call.1} parent=1 // pred_fallthru
      _
    %v22 = vld [vmem:[%s1] sm:$0xf]
    %v23 = vld [vmem:[%s2] sm:$0xf]
    %v24 = vld [vmem:[%s2 + $0x4] sm:$0xf]
    %v25 = vld [vmem:[%s2 + $0x8] sm:$0xf]
    %v26 = vld [vmem:[%s2 + $0xc] sm:$0xf]
    %v27 = vld [vmem:[%s3] sm:$0xf]
    %v28 = vld [vmem:[%s3 + $0x4] sm:$0xf]
    %v29 = vld [vmem:[%s3 + $0x8] sm:$0xf]
    %v30 = vld [vmem:[%s3 + $0xc] sm:$0xf]
    %v31 = vld [vmem:[%s3 + $0x10] sm:$0xf]
    %v32 = vld [vmem:[%s3 + $0x14] sm:$0xf]
    %v33 = vld [vmem:[%s3 + $0x18] sm:$0xf]
    %v34 = vld [vmem:[%s3 + $0x1c] sm:$0xf]
    %v35 = vld [vmem:[%s4] sm:$0x1]
    %v37 = vlaneseq
    %v38 = vshrl.u32 %v37, 7
    %v39 = vsub.s32 0, %v38
    %v40 = vrot.slane %v35, %v39
    %v42 = vld [vmem:[%s0] sm:$0xff]
    %v43 = vpack.c.bf16 %v42, %v42
    %vm44 = vcmask 64512
    %v46 = vsel %vm44, %v22, 0
    %vm48 = vcmask 1043456
    %v50 = vsel %vm48, %v43, 0
    %52 = vmatprep.subr.bf16.mxu0 0
    %53 = vmatpush1.bf16.msra.mxu0 %v50
    %54 = vmatprep.subr.bf16.mxu0 0
    %55 = vmatpush1.bf16.msra.mxu0 0
    %56 = vmatprep.subr.bf16.mxu0 0
    %57 = vmatpush1.bf16.msra.mxu0 0
    %58 = vmatprep.subr.bf16.mxu0 0
    %59 = vmatpush1.bf16.msra.mxu0 0
    %60 = vmatprep.subr.bf16.mxu0 0
    %61 = vmatpush1.bf16.msra.mxu0 0
    %62 = vmatprep.subr.bf16.mxu0 0
    %63 = vmatpush1.bf16.msra.mxu0 0
    %64 = vmatprep.subr.bf16.mxu0 0
    %65 = vmatpush1.bf16.msra.mxu0 0
    %66 = vmatprep.subr.bf16.mxu0 0
    %67 = vmatpush1.bf16.msra.mxu0 0
    %68 = vmatprep.subr.bf16.mxu0 0
    %69 = vmatpush1.bf16.msra.mxu0 0
    %70 = vmatprep.subr.bf16.mxu0 0
    %71 = vmatpush1.bf16.msra.mxu0 0
    %72 = vmatprep.subr.bf16.mxu0 0
    %73 = vmatpush1.bf16.msra.mxu0 0
    %74 = vmatprep.subr.bf16.mxu0 0
    %75 = vmatpush1.bf16.msra.mxu0 0
    %76 = vmatprep.subr.bf16.mxu0 0
    %77 = vmatpush1.bf16.msra.mxu0 0
    %78 = vmatprep.subr.bf16.mxu0 0
    %79 = vmatpush1.bf16.msra.mxu0 0
    %80 = vmatprep.subr.bf16.mxu0 0
    %81 = vmatpush1.bf16.msra.mxu0 0
    %82 = vmatprep.subr.bf16.mxu0 0
    %83 = vmatpush1.bf16.msra.mxu0 0
    %84 = vmatprep.mubr.bf16.mxu0 0
    %85 = vmatmul.mubr.bf16.gmra.mrb[0].mxu0 %v46
    %v86 = vpop.f32.mrb[0].mxu0
    %v87 = vadd.f32 0.0, %v86
    %v88 = vpop.f32.mrb[0].mxu0
    %v89 = vpop.f32.mrb[0].mxu0
    %v90 = vpop.f32.mrb[0].mxu0
    %91 = vdwg.mxu0
    %v92 = vsub.f32 %v87, %v42
    %v94 = vrot.slane %v42, 4
    %95 = vrot.lane.b32.xlu0 %v94, 16
    %v96 = vpop.permute.xlu0 %95
    %vm98 = vcmask 130048
    %v99 = vsel %vm98, %v42, %v96
    %v100 = vpack.c.bf16 %v99, %v99
    %v105 = vunpack.c.l.b16 %v23
    %v106 = vunpack.c.l.b16 %v24
    %v107 = vunpack.c.l.b16 %v25
    %v108 = vunpack.c.l.b16 %v26
    %v109 = vpack.c.b16 %v106, %v105
    %v110 = vpack.c.b16 %v108, %v107
    %vm113 = vcmask 261120
    %v115 = vsel %vm113, %v100, 0
    %117 = vmatprep.subr.bf16.mxu0 0
    %118 = vmatpush1.bf16.msra.mxu0 %v109
    %119 = vmatprep.subr.bf16.mxu0 0
    %120 = vmatpush1.bf16.msra.mxu0 %v110
    %121 = vmatprep.subr.bf16.mxu0 0
    %122 = vmatpush1.bf16.msra.mxu0 0
    %123 = vmatprep.subr.bf16.mxu0 0
    %124 = vmatpush1.bf16.msra.mxu0 0
    %125 = vmatprep.subr.bf16.mxu0 0
    %126 = vmatpush1.bf16.msra.mxu0 0
    %127 = vmatprep.subr.bf16.mxu0 0
    %128 = vmatpush1.bf16.msra.mxu0 0
    %129 = vmatprep.subr.bf16.mxu0 0
    %130 = vmatpush1.bf16.msra.mxu0 0
    %131 = vmatprep.subr.bf16.mxu0 0
    %132 = vmatpush1.bf16.msra.mxu0 0
    %133 = vmatprep.subr.bf16.mxu0 0
    %134 = vmatpush1.bf16.msra.mxu0 0
    %135 = vmatprep.subr.bf16.mxu0 0
    %136 = vmatpush1.bf16.msra.mxu0 0
    %137 = vmatprep.subr.bf16.mxu0 0
    %138 = vmatpush1.bf16.msra.mxu0 0
    %139 = vmatprep.subr.bf16.mxu0 0
    %140 = vmatpush1.bf16.msra.mxu0 0
    %141 = vmatprep.subr.bf16.mxu0 0
    %142 = vmatpush1.bf16.msra.mxu0 0
    %143 = vmatprep.subr.bf16.mxu0 0
    %144 = vmatpush1.bf16.msra.mxu0 0
    %145 = vmatprep.subr.bf16.mxu0 0
    %146 = vmatpush1.bf16.msra.mxu0 0
    %147 = vmatprep.subr.bf16.mxu0 0
    %148 = vmatpush1.bf16.msra.mxu0 0
    %149 = vmatprep.mubr.bf16.mxu0 0
    %150 = vmatmul.mubr.bf16.gmra.mrb[0].mxu0 %v115
    %v151 = vpop.f32.mrb[0].mxu0
    %v152 = vadd.f32 %v40, %v151
    %v153 = vpop.f32.mrb[0].mxu0
    %v154 = vpop.f32.mrb[0].mxu0
    %v155 = vpop.f32.mrb[0].mxu0
    %156 = vdwg.mxu0
    %v157 = vmax.f32 %v152, 0.0
    %v158 = vpack.c.bf16 %v157, %v157
    %v167 = vunpack.c.l.b16 %v27
    %v168 = vunpack.c.l.b16 %v28
    %v169 = vunpack.c.l.b16 %v29
    %v170 = vunpack.c.l.b16 %v30
    %v171 = vunpack.c.l.b16 %v31
    %v172 = vunpack.c.l.b16 %v32
    %v173 = vunpack.c.l.b16 %v33
    %v174 = vunpack.c.l.b16 %v34
    %v175 = vpack.c.b16 %v168, %v167
    %v176 = vpack.c.b16 %v170, %v169
    %v177 = vpack.c.b16 %v172, %v171
    %v178 = vpack.c.b16 %v174, %v173
    %183 = vrot.lane.b32.xlu0 %v40, 64
    %v184 = vpop.permute.xlu0 %183
    %vm186 = vcmask 523264
    %v188 = vsel %vm186, %v158, 0
    %190 = vmatprep.subr.bf16.mxu0 0
    %191 = vmatpush1.bf16.msra.mxu0 %v175
    %192 = vmatprep.subr.bf16.mxu0 0
    %193 = vmatpush1.bf16.msra.mxu0 %v176
    %194 = vmatprep.subr.bf16.mxu0 0
    %195 = vmatpush1.bf16.msra.mxu0 %v177
    %196 = vmatprep.subr.bf16.mxu0 0
    %197 = vmatpush1.bf16.msra.mxu0 %v178
    %198 = vmatprep.subr.bf16.mxu0 0
    %199 = vmatpush1.bf16.msra.mxu0 0
    %200 = vmatprep.subr.bf16.mxu0 0
    %201 = vmatpush1.bf16.msra.mxu0 0
    %202 = vmatprep.subr.bf16.mxu0 0
    %203 = vmatpush1.bf16.msra.mxu0 0
    %204 = vmatprep.subr.bf16.mxu0 0
    %205 = vmatpush1.bf16.msra.mxu0 0
    %206 = vmatprep.subr.bf16.mxu0 0
    %207 = vmatpush1.bf16.msra.mxu0 0
    %208 = vmatprep.subr.bf16.mxu0 0
    %209 = vmatpush1.bf16.msra.mxu0 0
    %210 = vmatprep.subr.bf16.mxu0 0
    %211 = vmatpush1.bf16.msra.mxu0 0
    %212 = vmatprep.subr.bf16.mxu0 0
    %213 = vmatpush1.bf16.msra.mxu0 0
    %214 = vmatprep.subr.bf16.mxu0 0
    %215 = vmatpush1.bf16.msra.mxu0 0
    %216 = vmatprep.subr.bf16.mxu0 0
    %217 = vmatpush1.bf16.msra.mxu0 0
    %218 = vmatprep.subr.bf16.mxu0 0
    %219 = vmatpush1.bf16.msra.mxu0 0
    %220 = vmatprep.subr.bf16.mxu0 0
    %221 = vmatpush1.bf16.msra.mxu0 0
    %222 = vmatprep.mubr.bf16.mxu0 0
    %223 = vmatmul.mubr.bf16.gmra.mrb[0].mxu0 %v188
    %v224 = vpop.f32.mrb[0].mxu0
    %v225 = vadd.f32 %v184, %v224
    %v226 = vpop.f32.mrb[0].mxu0
    %v227 = vpop.f32.mrb[0].mxu0
    %v228 = vpop.f32.mrb[0].mxu0
    %229 = vdwg.mxu0
    %v230 = vxor.u32 %v225, 2147483648
    %v231 = vmul.f32 %v230, 1.442695
    %v232 = vpow.pop %v231
    %v233 = vadd.f32 %v232, 1.0
    %v234 = vrcp.pop %v233
    %v235 = vmul.f32 1.0, %v234
    %v237 = vrot.slane %v235, 4
    %v239 = vsel %vm48, %v235, %v237
    %v240 = vmul.f32 %v239, %v92
    %v241 = vmul.f32 %v240, 0.33333334
    %v242 = vadd.f32 %v42, %v241
    %v243 = vpack.c.bf16 %v242, %v242
    %v245 = vsel %vm48, %v243, 0
    %247 = vmatprep.subr.bf16.mxu0 0
    %248 = vmatpush1.bf16.msra.mxu0 %v245
    %249 = vmatprep.subr.bf16.mxu0 0
    %250 = vmatpush1.bf16.msra.mxu0 0
    %251 = vmatprep.subr.bf16.mxu0 0
    %252 = vmatpush1.bf16.msra.mxu0 0
    %253 = vmatprep.subr.bf16.mxu0 0
    %254 = vmatpush1.bf16.msra.mxu0 0
    %255 = vmatprep.subr.bf16.mxu0 0
    %256 = vmatpush1.bf16.msra.mxu0 0
    %257 = vmatprep.subr.bf16.mxu0 0
    %258 = vmatpush1.bf16.msra.mxu0 0
    %259 = vmatprep.subr.bf16.mxu0 0
    %260 = vmatpush1.bf16.msra.mxu0 0
    %261 = vmatprep.subr.bf16.mxu0 0
    %262 = vmatpush1.bf16.msra.mxu0 0
    %263 = vmatprep.subr.bf16.mxu0 0
    %264 = vmatpush1.bf16.msra.mxu0 0
    %265 = vmatprep.subr.bf16.mxu0 0
    %266 = vmatpush1.bf16.msra.mxu0 0
    %267 = vmatprep.subr.bf16.mxu0 0
    %268 = vmatpush1.bf16.msra.mxu0 0
    %269 = vmatprep.subr.bf16.mxu0 0
    %270 = vmatpush1.bf16.msra.mxu0 0
    %271 = vmatprep.subr.bf16.mxu0 0
    %272 = vmatpush1.bf16.msra.mxu0 0
    %273 = vmatprep.subr.bf16.mxu0 0
    %274 = vmatpush1.bf16.msra.mxu0 0
    %275 = vmatprep.subr.bf16.mxu0 0
    %276 = vmatpush1.bf16.msra.mxu0 0
    %277 = vmatprep.subr.bf16.mxu0 0
    %278 = vmatpush1.bf16.msra.mxu0 0
    %279 = vmatprep.mubr.bf16.mxu0 0
    %280 = vmatmul.mubr.bf16.gmra.mrb[0].mxu0 %v46
    %v281 = vpop.f32.mrb[0].mxu0
    %v282 = vadd.f32 0.0, %v281
    %v283 = vpop.f32.mrb[0].mxu0
    %v284 = vpop.f32.mrb[0].mxu0
    %v285 = vpop.f32.mrb[0].mxu0
    %286 = vdwg.mxu0
    %v287 = vsub.f32 %v282, %v242
    %v289 = vrot.slane %v242, 4
    %290 = vrot.lane.b32.xlu0 %v289, 16
    %v291 = vpop.permute.xlu0 %290
    %v293 = vsel %vm98, %v242, %v291
    %v294 = vpack.c.bf16 %v293, %v293
    %v296 = vsel %vm113, %v294, 0
    %298 = vmatprep.subr.bf16.mxu0 0
    %299 = vmatpush1.bf16.msra.mxu0 %v109
    %300 = vmatprep.subr.bf16.mxu0 0
    %301 = vmatpush1.bf16.msra.mxu0 %v110
    %302 = vmatprep.subr.bf16.mxu0 0
    %303 = vmatpush1.bf16.msra.mxu0 0
    %304 = vmatprep.subr.bf16.mxu0 0
    %305 = vmatpush1.bf16.msra.mxu0 0
    %306 = vmatprep.subr.bf16.mxu0 0
    %307 = vmatpush1.bf16.msra.mxu0 0
    %308 = vmatprep.subr.bf16.mxu0 0
    %309 = vmatpush1.bf16.msra.mxu0 0
    %310 = vmatprep.subr.bf16.mxu0 0
    %311 = vmatpush1.bf16.msra.mxu0 0
    %312 = vmatprep.subr.bf16.mxu0 0
    %313 = vmatpush1.bf16.msra.mxu0 0
    %314 = vmatprep.subr.bf16.mxu0 0
    %315 = vmatpush1.bf16.msra.mxu0 0
    %316 = vmatprep.subr.bf16.mxu0 0
    %317 = vmatpush1.bf16.msra.mxu0 0
    %318 = vmatprep.subr.bf16.mxu0 0
    %319 = vmatpush1.bf16.msra.mxu0 0
    %320 = vmatprep.subr.bf16.mxu0 0
    %321 = vmatpush1.bf16.msra.mxu0 0
    %322 = vmatprep.subr.bf16.mxu0 0
    %323 = vmatpush1.bf16.msra.mxu0 0
    %324 = vmatprep.subr.bf16.mxu0 0
    %325 = vmatpush1.bf16.msra.mxu0 0
    %326 = vmatprep.subr.bf16.mxu0 0
    %327 = vmatpush1.bf16.msra.mxu0 0
    %328 = vmatprep.subr.bf16.mxu0 0
    %329 = vmatpush1.bf16.msra.mxu0 0
    %330 = vmatprep.mubr.bf16.mxu0 0
    %331 = vmatmul.mubr.bf16.gmra.mrb[0].mxu0 %v296
    %v332 = vpop.f32.mrb[0].mxu0
    %v333 = vadd.f32 %v40, %v332
    %v334 = vpop.f32.mrb[0].mxu0
    %v335 = vpop.f32.mrb[0].mxu0
    %v336 = vpop.f32.mrb[0].mxu0
    %337 = vdwg.mxu0
    %v338 = vmax.f32 %v333, 0.0
    %v339 = vpack.c.bf16 %v338, %v338
    %v341 = vsel %vm186, %v339, 0
    %343 = vmatprep.subr.bf16.mxu0 0
    %344 = vmatpush1.bf16.msra.mxu0 %v175
    %345 = vmatprep.subr.bf16.mxu0 0
    %346 = vmatpush1.bf16.msra.mxu0 %v176
    %347 = vmatprep.subr.bf16.mxu0 0
    %348 = vmatpush1.bf16.msra.mxu0 %v177
    %349 = vmatprep.subr.bf16.mxu0 0
    %350 = vmatpush1.bf16.msra.mxu0 %v178
    %351 = vmatprep.subr.bf16.mxu0 0
    %352 = vmatpush1.bf16.msra.mxu0 0
    %353 = vmatprep.subr.bf16.mxu0 0
    %354 = vmatpush1.bf16.msra.mxu0 0
    %355 = vmatprep.subr.bf16.mxu0 0
    %356 = vmatpush1.bf16.msra.mxu0 0
    %357 = vmatprep.subr.bf16.mxu0 0
    %358 = vmatpush1.bf16.msra.mxu0 0
    %359 = vmatprep.subr.bf16.mxu0 0
    %360 = vmatpush1.bf16.msra.mxu0 0
    %361 = vmatprep.subr.bf16.mxu0 0
    %362 = vmatpush1.bf16.msra.mxu0 0
    %363 = vmatprep.subr.bf16.mxu0 0
    %364 = vmatpush1.bf16.msra.mxu0 0
    %365 = vmatprep.subr.bf16.mxu0 0
    %366 = vmatpush1.bf16.msra.mxu0 0
    %367 = vmatprep.subr.bf16.mxu0 0
    %368 = vmatpush1.bf16.msra.mxu0 0
    %369 = vmatprep.subr.bf16.mxu0 0
    %370 = vmatpush1.bf16.msra.mxu0 0
    %371 = vmatprep.subr.bf16.mxu0 0
    %372 = vmatpush1.bf16.msra.mxu0 0
    %373 = vmatprep.subr.bf16.mxu0 0
    %374 = vmatpush1.bf16.msra.mxu0 0
    %375 = vmatprep.mubr.bf16.mxu0 0
    %376 = vmatmul.mubr.bf16.gmra.mrb[0].mxu0 %v341
    %v377 = vpop.f32.mrb[0].mxu0
    %v378 = vadd.f32 %v184, %v377
    %v379 = vpop.f32.mrb[0].mxu0
    %v380 = vpop.f32.mrb[0].mxu0
    %v381 = vpop.f32.mrb[0].mxu0
    %382 = vdwg.mxu0
    %v383 = vxor.u32 %v378, 2147483648
    %v384 = vmul.f32 %v383, 1.442695
    %v385 = vpow.pop %v384
    %v386 = vadd.f32 %v385, 1.0
    %v387 = vrcp.pop %v386
    %v388 = vmul.f32 1.0, %v387
    %v390 = vrot.slane %v388, 4
    %v392 = vsel %vm48, %v388, %v390
    %v393 = vmul.f32 %v392, %v287
    %v394 = vmul.f32 %v393, 0.33333334
    %v395 = vadd.f32 %v242, %v394
    %v396 = vpack.c.bf16 %v395, %v395
    %v398 = vsel %vm48, %v396, 0
    %400 = vmatprep.subr.bf16.mxu0 0
    %401 = vmatpush1.bf16.msra.mxu0 %v398
    %402 = vmatprep.subr.bf16.mxu0 0
    %403 = vmatpush1.bf16.msra.mxu0 0
    %404 = vmatprep.subr.bf16.mxu0 0
    %405 = vmatpush1.bf16.msra.mxu0 0
    %406 = vmatprep.subr.bf16.mxu0 0
    %407 = vmatpush1.bf16.msra.mxu0 0
    %408 = vmatprep.subr.bf16.mxu0 0
    %409 = vmatpush1.bf16.msra.mxu0 0
    %410 = vmatprep.subr.bf16.mxu0 0
    %411 = vmatpush1.bf16.msra.mxu0 0
    %412 = vmatprep.subr.bf16.mxu0 0
    %413 = vmatpush1.bf16.msra.mxu0 0
    %414 = vmatprep.subr.bf16.mxu0 0
    %415 = vmatpush1.bf16.msra.mxu0 0
    %416 = vmatprep.subr.bf16.mxu0 0
    %417 = vmatpush1.bf16.msra.mxu0 0
    %418 = vmatprep.subr.bf16.mxu0 0
    %419 = vmatpush1.bf16.msra.mxu0 0
    %420 = vmatprep.subr.bf16.mxu0 0
    %421 = vmatpush1.bf16.msra.mxu0 0
    %422 = vmatprep.subr.bf16.mxu0 0
    %423 = vmatpush1.bf16.msra.mxu0 0
    %424 = vmatprep.subr.bf16.mxu0 0
    %425 = vmatpush1.bf16.msra.mxu0 0
    %426 = vmatprep.subr.bf16.mxu0 0
    %427 = vmatpush1.bf16.msra.mxu0 0
    %428 = vmatprep.subr.bf16.mxu0 0
    %429 = vmatpush1.bf16.msra.mxu0 0
    %430 = vmatprep.subr.bf16.mxu0 0
    %431 = vmatpush1.bf16.msra.mxu0 0
    %432 = vmatprep.mubr.bf16.mxu0 0
    %433 = vmatmul.mubr.bf16.gmra.mrb[0].mxu0 %v46
    %v434 = vpop.f32.mrb[0].mxu0
    %v435 = vadd.f32 0.0, %v434
    %v436 = vpop.f32.mrb[0].mxu0
    %v437 = vpop.f32.mrb[0].mxu0
    %v438 = vpop.f32.mrb[0].mxu0
    %439 = vdwg.mxu0
    %v440 = vsub.f32 %v435, %v395
    %v442 = vrot.slane %v395, 4
    %443 = vrot.lane.b32.xlu0 %v442, 16
    %v444 = vpop.permute.xlu0 %443
    %v446 = vsel %vm98, %v395, %v444
    %v447 = vpack.c.bf16 %v446, %v446
    %v449 = vsel %vm113, %v447, 0
    %451 = vmatprep.subr.bf16.mxu0 0
    %452 = vmatpush1.bf16.msra.mxu0 %v109
    %453 = vmatprep.subr.bf16.mxu0 0
    %454 = vmatpush1.bf16.msra.mxu0 %v110
    %455 = vmatprep.subr.bf16.mxu0 0
    %456 = vmatpush1.bf16.msra.mxu0 0
    %457 = vmatprep.subr.bf16.mxu0 0
    %458 = vmatpush1.bf16.msra.mxu0 0
    %459 = vmatprep.subr.bf16.mxu0 0
    %460 = vmatpush1.bf16.msra.mxu0 0
    %461 = vmatprep.subr.bf16.mxu0 0
    %462 = vmatpush1.bf16.msra.mxu0 0
    %463 = vmatprep.subr.bf16.mxu0 0
    %464 = vmatpush1.bf16.msra.mxu0 0
    %465 = vmatprep.subr.bf16.mxu0 0
    %466 = vmatpush1.bf16.msra.mxu0 0
    %467 = vmatprep.subr.bf16.mxu0 0
    %468 = vmatpush1.bf16.msra.mxu0 0
    %469 = vmatprep.subr.bf16.mxu0 0
    %470 = vmatpush1.bf16.msra.mxu0 0
    %471 = vmatprep.subr.bf16.mxu0 0
    %472 = vmatpush1.bf16.msra.mxu0 0
    %473 = vmatprep.subr.bf16.mxu0 0
    %474 = vmatpush1.bf16.msra.mxu0 0
    %475 = vmatprep.subr.bf16.mxu0 0
    %476 = vmatpush1.bf16.msra.mxu0 0
    %477 = vmatprep.subr.bf16.mxu0 0
    %478 = vmatpush1.bf16.msra.mxu0 0
    %479 = vmatprep.subr.bf16.mxu0 0
    %480 = vmatpush1.bf16.msra.mxu0 0
    %481 = vmatprep.subr.bf16.mxu0 0
    %482 = vmatpush1.bf16.msra.mxu0 0
    %483 = vmatprep.mubr.bf16.mxu0 0
    %484 = vmatmul.mubr.bf16.gmra.mrb[0].mxu0 %v449
    %v485 = vpop.f32.mrb[0].mxu0
    %v486 = vadd.f32 %v40, %v485
    %v487 = vpop.f32.mrb[0].mxu0
    %v488 = vpop.f32.mrb[0].mxu0
    %v489 = vpop.f32.mrb[0].mxu0
    %490 = vdwg.mxu0
    %v491 = vmax.f32 %v486, 0.0
    %v492 = vpack.c.bf16 %v491, %v491
    %v494 = vsel %vm186, %v492, 0
    %496 = vmatprep.subr.bf16.mxu0 0
    %497 = vmatpush1.bf16.msra.mxu0 %v175
    %498 = vmatprep.subr.bf16.mxu0 0
    %499 = vmatpush1.bf16.msra.mxu0 %v176
    %500 = vmatprep.subr.bf16.mxu0 0
    %501 = vmatpush1.bf16.msra.mxu0 %v177
    %502 = vmatprep.subr.bf16.mxu0 0
    %503 = vmatpush1.bf16.msra.mxu0 %v178
    %504 = vmatprep.subr.bf16.mxu0 0
    %505 = vmatpush1.bf16.msra.mxu0 0
    %506 = vmatprep.subr.bf16.mxu0 0
    %507 = vmatpush1.bf16.msra.mxu0 0
    %508 = vmatprep.subr.bf16.mxu0 0
    %509 = vmatpush1.bf16.msra.mxu0 0
    %510 = vmatprep.subr.bf16.mxu0 0
    %511 = vmatpush1.bf16.msra.mxu0 0
    %512 = vmatprep.subr.bf16.mxu0 0
    %513 = vmatpush1.bf16.msra.mxu0 0
    %514 = vmatprep.subr.bf16.mxu0 0
    %515 = vmatpush1.bf16.msra.mxu0 0
    %516 = vmatprep.subr.bf16.mxu0 0
    %517 = vmatpush1.bf16.msra.mxu0 0
    %518 = vmatprep.subr.bf16.mxu0 0
    %519 = vmatpush1.bf16.msra.mxu0 0
    %520 = vmatprep.subr.bf16.mxu0 0
    %521 = vmatpush1.bf16.msra.mxu0 0
    %522 = vmatprep.subr.bf16.mxu0 0
    %523 = vmatpush1.bf16.msra.mxu0 0
    %524 = vmatprep.subr.bf16.mxu0 0
    %525 = vmatpush1.bf16.msra.mxu0 0
    %526 = vmatprep.subr.bf16.mxu0 0
    %527 = vmatpush1.bf16.msra.mxu0 0
    %528 = vmatprep.mubr.bf16.mxu0 0
    %529 = vmatmul.mubr.bf16.gmra.mrb[0].mxu0 %v494
    %v530 = vpop.f32.mrb[0].mxu0
    %v531 = vadd.f32 %v184, %v530
    %v532 = vpop.f32.mrb[0].mxu0
    %v533 = vpop.f32.mrb[0].mxu0
    %v534 = vpop.f32.mrb[0].mxu0
    %535 = vdwg.mxu0
    %v536 = vxor.u32 %v531, 2147483648
    %v537 = vmul.f32 %v536, 1.442695
    %v538 = vpow.pop %v537
    %v539 = vadd.f32 %v538, 1.0
    %v540 = vrcp.pop %v539
    %v541 = vmul.f32 1.0, %v540
    %v543 = vrot.slane %v541, 4
    %v545 = vsel %vm48, %v541, %v543
    %v546 = vmul.f32 %v545, %v440
    %v547 = vmul.f32 %v546, 0.33333334
    %v548 = vadd.f32 %v395, %v547
    %v550 = vrot.slane %v548, 4
    %v552 = vmul.f32 %v548, %v550
    %v554 = vsel %vm98, 1.0, 0
    %v557 = vsel %vm98, %v552, 0
    %559 = vmatprep.subr.mxu0 0.0
    %560 = vmatpush1.xpose.msra.mxu0 %v557
    %561 = vmatprep.subr.mxu0 0.0
    %562 = vmatpush1.xpose.msra.mxu0 0.0
    %563 = vmatprep.subr.mxu0 0.0
    %564 = vmatpush1.xpose.msra.mxu0 0.0
    %565 = vmatprep.subr.mxu0 0.0
    %566 = vmatpush1.xpose.msra.mxu0 0.0
    %567 = vmatprep.subr.mxu0 0.0
    %568 = vmatpush1.xpose.msra.mxu0 0.0
    %569 = vmatprep.subr.mxu0 0.0
    %570 = vmatpush1.xpose.msra.mxu0 0.0
    %571 = vmatprep.subr.mxu0 0.0
    %572 = vmatpush1.xpose.msra.mxu0 0.0
    %573 = vmatprep.subr.mxu0 0.0
    %574 = vmatpush1.xpose.msra.mxu0 0.0
    %575 = vmatprep.subr.mxu0 0.0
    %576 = vmatpush1.xpose.msra.mxu0 0.0
    %577 = vmatprep.subr.mxu0 0.0
    %578 = vmatpush1.xpose.msra.mxu0 0.0
    %579 = vmatprep.subr.mxu0 0.0
    %580 = vmatpush1.xpose.msra.mxu0 0.0
    %581 = vmatprep.subr.mxu0 0.0
    %582 = vmatpush1.xpose.msra.mxu0 0.0
    %583 = vmatprep.subr.mxu0 0.0
    %584 = vmatpush1.xpose.msra.mxu0 0.0
    %585 = vmatprep.subr.mxu0 0.0
    %586 = vmatpush1.xpose.msra.mxu0 0.0
    %587 = vmatprep.subr.mxu0 0.0
    %588 = vmatpush1.xpose.msra.mxu0 0.0
    %589 = vmatprep.subr.mxu0 0.0
    %590 = vmatpush1.xpose.msra.mxu0 0.0
    %591 = vmatprep.subr.mxu0 0.0
    %592 = vmatpush1.xpose.msra.mxu0 0.0
    %593 = vmatprep.subr.mxu0 0.0
    %594 = vmatpush1.xpose.msra.mxu0 0.0
    %595 = vmatprep.subr.mxu0 0.0
    %596 = vmatpush1.xpose.msra.mxu0 0.0
    %597 = vmatprep.subr.mxu0 0.0
    %598 = vmatpush1.xpose.msra.mxu0 0.0
    %599 = vmatprep.subr.mxu0 0.0
    %600 = vmatpush1.xpose.msra.mxu0 0.0
    %601 = vmatprep.subr.mxu0 0.0
    %602 = vmatpush1.xpose.msra.mxu0 0.0
    %603 = vmatprep.subr.mxu0 0.0
    %604 = vmatpush1.xpose.msra.mxu0 0.0
    %605 = vmatprep.subr.mxu0 0.0
    %606 = vmatpush1.xpose.msra.mxu0 0.0
    %607 = vmatprep.subr.mxu0 0.0
    %608 = vmatpush1.xpose.msra.mxu0 0.0
    %609 = vmatprep.subr.mxu0 0.0
    %610 = vmatpush1.xpose.msra.mxu0 0.0
    %611 = vmatprep.subr.mxu0 0.0
    %612 = vmatpush1.xpose.msra.mxu0 0.0
    %613 = vmatprep.subr.mxu0 0.0
    %614 = vmatpush1.xpose.msra.mxu0 0.0
    %615 = vmatprep.subr.mxu0 0.0
    %616 = vmatpush1.xpose.msra.mxu0 0.0
    %617 = vmatprep.subr.mxu0 0.0
    %618 = vmatpush1.xpose.msra.mxu0 0.0
    %619 = vmatprep.subr.mxu0 0.0
    %620 = vmatpush1.xpose.msra.mxu0 0.0
    %621 = vmatprep.subr.mxu0 0.0
    %622 = vmatpush1.xpose.msra.mxu0 0.0
    %623 = vmatprep.mubr.f32.mxu0 0.0
    %624 = vmatmul.mubr.f32.gmra.mrb[0].mxu0 %v554
    %v625 = vpop.f32.mrb[0].mxu0
    %v626 = vadd.f32 0.0, %v625
    %v627 = vpop.f32.mrb[0].mxu0
    %628 = vdwg.mxu0
    %v629 = vxor.u32 %v626, 2147483648
    %v630 = vmul.f32 %v629, 1.442695
    %v631 = vpow.pop %v630
    %v632 = vadd.f32 %v631, 1.0
    %v633 = vrcp.pop %v632
    %v634 = vmul.f32 1.0, %v633
    %vm635 = vcmask 24576
    %636 = vst.msk [vmem:[#allocation2] sm:$0x1] %vm635, %v634
    // Predicated region
    $region22: #{tpu_custom_call.1} parent=1 // pred_check
      _
    $region23: #{tpu_custom_call.1} parent=1 // pred_check_branch
      %638 = sbr.rel (0) target = $region25
    $region24: #{tpu_custom_call.1} parent=1 // pred_region
      %s640 = ssub.s32 16, 16
      %641 = vsyncadd [#allocation3], %s640
      %s643 = sshll.u32 [#allocation2], 4
      %s644 = int_to_ptr.vmem [resolvable:$true] %s643
      %646 = dma.vmem_to_hbm [thread:$0]  %s644, 16, %s5, [#allocation3]
    $region25: #{tpu_custom_call.1} parent=1 // pred_fallthru
      _
    // Predicated region
    $region26: #{tpu_custom_call.1} parent=1 // pred_check
      _
    $region27: #{tpu_custom_call.1} parent=1 // pred_check_branch
      %648 = sbr.rel (0) target = $region29
    $region28: #{tpu_custom_call.1} parent=1 // pred_region
      %649 = dma.done [#allocation3], 16
    $region29: #{tpu_custom_call.1} parent=1 // pred_fallthru
      _
    %650 = vsyncpa [#allocation3], 1

</llo_original>
